<compile_context>
chip_gen: v5e
topology: v5e:2x2
jax: 0.10.0
libtpu: 0.0.40
codegen_flags: <defaults>
</compile_context>

<pallas_src>
import functools

import jax
import jax.numpy as jnp
from jax.experimental import pallas as pl
from jax.experimental.pallas import tpu as pltpu


def _cluster_importance_kernel(
    x_ref, base_ref,
    w1_ref, b1_ref, w2_ref, b2_ref, w3_ref, b3_ref,   # encoder
    wi_ref, bi_ref,                                   # importance_func
    wa1_ref, ba1_ref, wa2_ref, ba2_ref,               # agent actor
    packed_ref,                                       # [output | probs | importance]
):
    """One batch tile.  Every row is independent, so a ragged last block (rows
    beyond B containing stale VMEM data) is harmless: those rows are never
    written back to HBM."""
    x = x_ref[...].astype(jnp.float32)

    # ---- encoder MLP: Linear -> tanh -> Linear -> tanh -> Linear -------------
    h = jnp.tanh(jnp.dot(x, w1_ref[...], preferred_element_type=jnp.float32)
                 + b1_ref[...])
    h = jnp.tanh(jnp.dot(h, w2_ref[...], preferred_element_type=jnp.float32)
                 + b2_ref[...])
    logits = (jnp.dot(h, w3_ref[...], preferred_element_type=jnp.float32)
              + b3_ref[...])

    # ---- Categorical(logits).probs == softmax(logits) ------------------------
    # Exact division (not the approx EUP reciprocal) so downstream argmax
    # agrees with the f32 reference on near-ties.
    m = jnp.max(logits, axis=-1, keepdims=True)
    e = jnp.exp(logits - m)
    probs = e / jnp.sum(e, axis=-1, keepdims=True)

    # ---- importance_func: Linear(C, D) -> sigmoid -----------------------------
    importance = jax.nn.sigmoid(
        jnp.dot(probs, wi_ref[...], preferred_element_type=jnp.float32)
        + bi_ref[...])

    # ---- masked input: importance * x + (1 - importance) * base_state --------
    new_in = importance * x + (1.0 - importance) * base_ref[...].astype(jnp.float32)

    # ---- agent actor (synthetic): Linear -> tanh -> Linear --------------------
    ha = jnp.tanh(jnp.dot(new_in, wa1_ref[...], preferred_element_type=jnp.float32)
                  + ba1_ref[...])
    out = (jnp.dot(ha, wa2_ref[...], preferred_element_type=jnp.float32)
           + ba2_ref[...])

    # ---- single lane-dense writeback ------------------------------------------
    packed_ref[...] = jnp.concatenate([out, probs, importance],
                                      axis=-1).astype(packed_ref.dtype)


def clustering_importance_forward(x, base_state, params, *, n_clusters, out_dim,
                                  batch_tile=1024):
    """x: (B, D) float32, base_state: (1, D) float32.

    Returns (action (B,) int32, output (B, A), probs (B, C), importance (B, D)).
    `batch_tile` is the primary tuning knob (rows per grid step, multiple of 8).
    """
    B, D = x.shape
    NU = params["w1"].shape[1]
    C = n_clusters
    A = out_dim
    PACKED = A + C + D

    # -- batch-tile selection ---------------------------------------------------
    # Large B: stream `batch_tile` rows per step (per-step overhead ~0.35 us, so
    # big tiles amortize it).  Small B: aim for >= 2 grid steps so both v7x
    # TensorCores get work; never go below the 8-row sublane granularity.
    if B > batch_tile:
        TB = max(8, (batch_tile // 8) * 8)
    elif B > 16:
        TB = min(B, (((B + 1) // 2) + 7) // 8 * 8)   # ~half the batch, mult. of 8
    else:
        TB = B                                        # single ragged-free block
    grid = (pl.cdiv(B, TB),)                          # ragged last block is fine

    # -- VMEM budget (lane-padded layout): only raise the scoped limit if needed.
    def _lanes(n):
        return ((n + 127) // 128) * 128

    blk_bytes = TB * _lanes(max(D, PACKED)) * 4
    weight_bytes = 4 * (sum(int(v.size) for v in params.values())
                        + int(base_state.size))
    # x (x2 double-buffer) + packed out (x2) + ~8 compiler temporaries, + weights.
    est_vmem = 12 * blk_bytes + 2 * weight_bytes
    vmem_limit = None
    if est_vmem > (16 << 20):                         # above v5e scoped default
        vmem_limit = int(min(max(est_vmem + (4 << 20), 32 << 20), 48 << 20))

    # -- specs -------------------------------------------------------------------
    def const_spec(shape):
        return pl.BlockSpec(shape, lambda i: (0, 0))   # VMEM-resident across grid

    def batch_spec(width):
        return pl.BlockSpec((TB, width), lambda i: (i, 0))

    def row(b):
        return b.reshape(1, -1)

    # -- advisory cost estimate for the XLA scheduler -----------------------------
    matmul_elems = D * NU + NU * NU + NU * C + C * D + D * NU + NU * A
    flops = 2 * B * matmul_elems + 8 * B * D
    transcendentals = B * (3 * NU + C + D)            # tanh x3, exp, sigmoid
    io_elems = B * D + D + B * PACKED
    cost = pl.CostEstimate(
        flops=int(flops),
        transcendentals=int(transcendentals),
        bytes_accessed=int(4 * io_elems + weight_bytes))

    packed = pl.pallas_call(
        _cluster_importance_kernel,
        out_shape=jax.ShapeDtypeStruct((B, PACKED), jnp.float32),
        grid=grid,
        in_specs=[
            batch_spec(D),            # x (tiled over batch)
            const_spec((1, D)),       # base_state
            const_spec((D, NU)),  const_spec((1, NU)),   # w1, b1
            const_spec((NU, NU)), const_spec((1, NU)),   # w2, b2
            const_spec((NU, C)),  const_spec((1, C)),    # w3, b3
            const_spec((C, D)),   const_spec((1, D)),    # wi, bi
            const_spec((D, NU)),  const_spec((1, NU)),   # wa1, ba1
            const_spec((NU, A)),  const_spec((1, A)),    # wa2, ba2
        ],
        out_specs=batch_spec(PACKED),
        compiler_params=pltpu.CompilerParams(
            dimension_semantics=("parallel",),
            vmem_limit_bytes=vmem_limit),
        cost_estimate=cost,
    )(x, base_state,
      params["w1"], row(params["b1"]),
      params["w2"], row(params["b2"]),
      params["w3"], row(params["b3"]),
      params["wi"], row(params["bi"]),
      params["wa1"], row(params["ba1"]),
      params["wa2"], row(params["ba2"]))

    # Split the packed writeback: [output | probs | importance].
    output = packed[:, :A]
    probs = packed[:, A:A + C]
    importance = packed[:, A + C:]

    # torch: action = argmax(output, dim=1) (first occurrence). Computed in the
    # wrapper so the kernel only writes one lane-dense float tile per step.
    action = jnp.argmax(output, axis=1).astype(jnp.int32)
    return action, output, probs, importance


def _init_params(key, input_dim, n_units, n_clusters, out_dim):
    """Deterministic synthetic parameters (layer_init-style scaling)."""
    ks = jax.random.split(key, 12)

    def lin(kw, kb, fan_in, fan_out, std):
        w = jax.random.normal(kw, (fan_in, fan_out), jnp.float32) * (
            std / jnp.sqrt(jnp.float32(fan_in)))
        b = jax.random.normal(kb, (fan_out,), jnp.float32) * 0.05
        return w, b

    w1, b1 = lin(ks[0], ks[1], input_dim, n_units, jnp.sqrt(2.0))
    w2, b2 = lin(ks[2], ks[3], n_units, n_units, jnp.sqrt(2.0))
    w3, b3 = lin(ks[4], ks[5], n_units, n_clusters, 1.0)
    wi, bi = lin(ks[6], ks[7], n_clusters, input_dim, 1.0)
    wa1, ba1 = lin(ks[8], ks[9], input_dim, n_units, jnp.sqrt(2.0))
    wa2, ba2 = lin(ks[10], ks[11], n_units, out_dim, 0.01)
    return dict(w1=w1, b1=b1, w2=w2, b2=b2, w3=w3, b3=b3,
                wi=wi, bi=bi, wa1=wa1, ba1=ba1, wa2=wa2, ba2=ba2)


def _reference_forward(x, base_state, p):
    """Pure-JAX reference for correctness checking."""
    h = jnp.tanh(x @ p["w1"] + p["b1"])
    h = jnp.tanh(h @ p["w2"] + p["b2"])
    logits = h @ p["w3"] + p["b3"]
    probs = jax.nn.softmax(logits, axis=-1)
    importance = jax.nn.sigmoid(probs @ p["wi"] + p["bi"])
    new_in = importance * x + (1.0 - importance) * base_state
    ha = jnp.tanh(new_in @ p["wa1"] + p["ba1"])
    out = ha @ p["wa2"] + p["ba2"]
    action = jnp.argmax(out, axis=1).astype(jnp.int32)
    return action, out, probs, importance


if __name__ == "__main__":
    # Small shapes consistent with the module: flat observations.
    INPUT_DIM = 32   # prod(observation_space.shape)
    N_UNITS = 32
    N_CLUSTERS = 8
    OUT_DIM = 4      # Discrete action space with 4 actions

    key = jax.random.PRNGKey(0)
    k_x, k_base, k_p, k_x2 = jax.random.split(key, 4)

    base_state = jax.random.normal(k_base, (1, INPUT_DIM), jnp.float32)
    params = _init_params(k_p, INPUT_DIM, N_UNITS, N_CLUSTERS, OUT_DIM)

    fwd = functools.partial(clustering_importance_forward,
                            n_clusters=N_CLUSTERS, out_dim=OUT_DIM)

    def check(x, **kw):
        action, output, probs, importance = jax.block_until_ready(
            fwd(x, base_state, params, **kw))
        r_action, r_output, r_probs, r_importance = _reference_forward(
            x, base_state, params)
        assert action.shape == r_action.shape
        assert bool(jnp.all(action == r_action))
        assert jnp.allclose(output, r_output, atol=2e-3, rtol=2e-3)
        assert jnp.allclose(probs, r_probs, atol=2e-3, rtol=2e-3)
        assert jnp.allclose(importance, r_importance, atol=2e-3, rtol=2e-3)

    # 1) single-block path (small batch, one ragged-free grid step)
    x_small = jax.random.normal(k_x, (8, INPUT_DIM), jnp.float32)
    check(x_small)

    # 2) auto tile split: B=40 -> TB=24, grid=2 with a ragged last block
    #    (exercises masked boundary writeback and both-TC parallel semantics)
    x_big = jax.random.normal(k_x2, (40, INPUT_DIM), jnp.float32)
    check(x_big)

    # 3) explicit small tile: TB=16, grid=3, ragged last block of 8 rows
    check(x_big, batch_tile=16)

    # TODO(synk): `fit_cluster_action` (data-dependent boolean-mask group means)
    # and sample=True stochastic action sampling are not part of forward();
    # only the deterministic forward path is implemented here.
    print("KERNEL_OK")
</pallas_src>

<mosaic_0001>
module attributes {stable_mosaic.version = 11 : i64} {
  func.func @_cluster_importance_kernel(%arg0: i32, %arg1: memref<8x32xf32, #tpu.memory_space<vmem>>, %arg2: memref<1x32xf32, #tpu.memory_space<vmem>>, %arg3: memref<32x32xf32, #tpu.memory_space<vmem>>, %arg4: memref<1x32xf32, #tpu.memory_space<vmem>>, %arg5: memref<32x32xf32, #tpu.memory_space<vmem>>, %arg6: memref<1x32xf32, #tpu.memory_space<vmem>>, %arg7: memref<32x8xf32, #tpu.memory_space<vmem>>, %arg8: memref<1x8xf32, #tpu.memory_space<vmem>>, %arg9: memref<8x32xf32, #tpu.memory_space<vmem>>, %arg10: memref<1x32xf32, #tpu.memory_space<vmem>>, %arg11: memref<32x32xf32, #tpu.memory_space<vmem>>, %arg12: memref<1x32xf32, #tpu.memory_space<vmem>>, %arg13: memref<32x4xf32, #tpu.memory_space<vmem>>, %arg14: memref<1x4xf32, #tpu.memory_space<vmem>>, %arg15: memref<8x44xf32, #tpu.memory_space<vmem>>) attributes {dimension_semantics = [#tpu.dimension_semantics<parallel>], iteration_bounds = array<i64: 1>, scalar_prefetch = 0 : i64, scratch_operands = 0 : i64, tpu.core_type = #tpu.core_type<tc>, window_params = [{transform_indices = @transform_0, window_bounds = array<i64: 8, 32>}, {pipeline_mode = #tpu.pipeline_mode<synchronous>, transform_indices = @transform_1, window_bounds = array<i64: 1, 32>}, {pipeline_mode = #tpu.pipeline_mode<synchronous>, transform_indices = @transform_2, window_bounds = array<i64: 32, 32>}, {pipeline_mode = #tpu.pipeline_mode<synchronous>, transform_indices = @transform_3, window_bounds = array<i64: 1, 32>}, {pipeline_mode = #tpu.pipeline_mode<synchronous>, transform_indices = @transform_4, window_bounds = array<i64: 32, 32>}, {pipeline_mode = #tpu.pipeline_mode<synchronous>, transform_indices = @transform_5, window_bounds = array<i64: 1, 32>}, {pipeline_mode = #tpu.pipeline_mode<synchronous>, transform_indices = @transform_6, window_bounds = array<i64: 32, 8>}, {pipeline_mode = #tpu.pipeline_mode<synchronous>, transform_indices = @transform_7, window_bounds = array<i64: 1, 8>}, {pipeline_mode = #tpu.pipeline_mode<synchronous>, transform_indices = @transform_8, window_bounds = array<i64: 8, 32>}, {pipeline_mode = #tpu.pipeline_mode<synchronous>, transform_indices = @transform_9, window_bounds = array<i64: 1, 32>}, {pipeline_mode = #tpu.pipeline_mode<synchronous>, transform_indices = @transform_10, window_bounds = array<i64: 32, 32>}, {pipeline_mode = #tpu.pipeline_mode<synchronous>, transform_indices = @transform_11, window_bounds = array<i64: 1, 32>}, {pipeline_mode = #tpu.pipeline_mode<synchronous>, transform_indices = @transform_12, window_bounds = array<i64: 32, 4>}, {pipeline_mode = #tpu.pipeline_mode<synchronous>, transform_indices = @transform_13, window_bounds = array<i64: 1, 4>}, {transform_indices = @transform_14, window_bounds = array<i64: 8, 44>}]} {
    %c0 = arith.constant 0 : index
    %c0_0 = arith.constant 0 : index
    %0 = vector.load %arg1[%c0, %c0_0] : memref<8x32xf32, #tpu.memory_space<vmem>>, vector<8x32xf32>
    %c0_1 = arith.constant 0 : index
    %c0_2 = arith.constant 0 : index
    %1 = vector.load %arg3[%c0_1, %c0_2] : memref<32x32xf32, #tpu.memory_space<vmem>>, vector<32x32xf32>
    %cst = arith.constant dense<0.000000e+00> : vector<8x32xf32>
    %2 = tpu.matmul %0, %1, %cst {dimension_numbers = #tpu.dot_dimension_numbers<[1], [0], [0], [1], [0, 0, 1, 1], [], []>} : vector<8x32xf32>, vector<32x32xf32>, vector<8x32xf32> -> vector<8x32xf32>
    %c0_3 = arith.constant 0 : index
    %c0_4 = arith.constant 0 : index
    %3 = vector.load %arg4[%c0_3, %c0_4] : memref<1x32xf32, #tpu.memory_space<vmem>>, vector<1x32xf32>
    %4 = vector.broadcast %3 : vector<1x32xf32> to vector<8x32xf32>
    %5 = arith.addf %2, %4 : vector<8x32xf32>
    %6 = math.tanh %5 : vector<8x32xf32>
    %c0_5 = arith.constant 0 : index
    %c0_6 = arith.constant 0 : index
    %7 = vector.load %arg5[%c0_5, %c0_6] : memref<32x32xf32, #tpu.memory_space<vmem>>, vector<32x32xf32>
    %cst_7 = arith.constant dense<0.000000e+00> : vector<8x32xf32>
    %8 = tpu.matmul %6, %7, %cst_7 {dimension_numbers = #tpu.dot_dimension_numbers<[1], [0], [0], [1], [0, 0, 1, 1], [], []>} : vector<8x32xf32>, vector<32x32xf32>, vector<8x32xf32> -> vector<8x32xf32>
    %c0_8 = arith.constant 0 : index
    %c0_9 = arith.constant 0 : index
    %9 = vector.load %arg6[%c0_8, %c0_9] : memref<1x32xf32, #tpu.memory_space<vmem>>, vector<1x32xf32>
    %10 = vector.broadcast %9 : vector<1x32xf32> to vector<8x32xf32>
    %11 = arith.addf %8, %10 : vector<8x32xf32>
    %12 = math.tanh %11 : vector<8x32xf32>
    %c0_10 = arith.constant 0 : index
    %c0_11 = arith.constant 0 : index
    %13 = vector.load %arg7[%c0_10, %c0_11] : memref<32x8xf32, #tpu.memory_space<vmem>>, vector<32x8xf32>
    %cst_12 = arith.constant dense<0.000000e+00> : vector<8x8xf32>
    %14 = tpu.matmul %12, %13, %cst_12 {dimension_numbers = #tpu.dot_dimension_numbers<[1], [0], [0], [1], [0, 0, 1, 1], [], []>} : vector<8x32xf32>, vector<32x8xf32>, vector<8x8xf32> -> vector<8x8xf32>
    %c0_13 = arith.constant 0 : index
    %c0_14 = arith.constant 0 : index
    %15 = vector.load %arg8[%c0_13, %c0_14] : memref<1x8xf32, #tpu.memory_space<vmem>>, vector<1x8xf32>
    %16 = vector.broadcast %15 : vector<1x8xf32> to vector<8x8xf32>
    %17 = arith.addf %14, %16 : vector<8x8xf32>
    %cst_15 = arith.constant dense<0xFF800000> : vector<8xf32>
    %18 = vector.multi_reduction <maximumf>, %17, %cst_15 [1] : vector<8x8xf32> to vector<8xf32>
    %19 = vector.shape_cast %18 : vector<8xf32> to vector<8x1xf32>
    %20 = vector.broadcast %19 : vector<8x1xf32> to vector<8x8xf32>
    %21 = arith.subf %17, %20 : vector<8x8xf32>
    %22 = math.exp %21 : vector<8x8xf32>
    %cst_16 = arith.constant dense<0.000000e+00> : vector<8xf32>
    %23 = vector.multi_reduction <add>, %22, %cst_16 [1] : vector<8x8xf32> to vector<8xf32>
    %24 = vector.shape_cast %23 : vector<8xf32> to vector<8x1xf32>
    %25 = vector.broadcast %24 : vector<8x1xf32> to vector<8x8xf32>
    %26 = arith.divf %22, %25 : vector<8x8xf32>
    %c0_17 = arith.constant 0 : index
    %c0_18 = arith.constant 0 : index
    %27 = vector.load %arg9[%c0_17, %c0_18] : memref<8x32xf32, #tpu.memory_space<vmem>>, vector<8x32xf32>
    %cst_19 = arith.constant dense<0.000000e+00> : vector<8x32xf32>
    %28 = tpu.matmul %26, %27, %cst_19 {dimension_numbers = #tpu.dot_dimension_numbers<[1], [0], [0], [1], [0, 0, 1, 1], [], []>} : vector<8x8xf32>, vector<8x32xf32>, vector<8x32xf32> -> vector<8x32xf32>
    %c0_20 = arith.constant 0 : index
    %c0_21 = arith.constant 0 : index
    %29 = vector.load %arg10[%c0_20, %c0_21] : memref<1x32xf32, #tpu.memory_space<vmem>>, vector<1x32xf32>
    %30 = vector.broadcast %29 : vector<1x32xf32> to vector<8x32xf32>
    %31 = arith.addf %28, %30 : vector<8x32xf32>
    %32 = arith.negf %31 : vector<8x32xf32>
    %33 = math.exp %32 : vector<8x32xf32>
    %cst_22 = arith.constant 1.000000e+00 : f32
    %34 = vector.broadcast %cst_22 : f32 to vector<8x32xf32>
    %35 = arith.addf %34, %33 : vector<8x32xf32>
    %36 = arith.divf %34, %35 : vector<8x32xf32>
    %37 = arith.mulf %36, %0 : vector<8x32xf32>
    %cst_23 = arith.constant 1.000000e+00 : f32
    %38 = vector.broadcast %cst_23 : f32 to vector<8x32xf32>
    %39 = arith.subf %38, %36 : vector<8x32xf32>
    %c0_24 = arith.constant 0 : index
    %c0_25 = arith.constant 0 : index
    %40 = vector.load %arg2[%c0_24, %c0_25] : memref<1x32xf32, #tpu.memory_space<vmem>>, vector<1x32xf32>
    %41 = vector.broadcast %40 : vector<1x32xf32> to vector<8x32xf32>
    %42 = arith.mulf %39, %41 : vector<8x32xf32>
    %43 = arith.addf %37, %42 : vector<8x32xf32>
    %c0_26 = arith.constant 0 : index
    %c0_27 = arith.constant 0 : index
    %44 = vector.load %arg11[%c0_26, %c0_27] : memref<32x32xf32, #tpu.memory_space<vmem>>, vector<32x32xf32>
    %cst_28 = arith.constant dense<0.000000e+00> : vector<8x32xf32>
    %45 = tpu.matmul %43, %44, %cst_28 {dimension_numbers = #tpu.dot_dimension_numbers<[1], [0], [0], [1], [0, 0, 1, 1], [], []>} : vector<8x32xf32>, vector<32x32xf32>, vector<8x32xf32> -> vector<8x32xf32>
    %c0_29 = arith.constant 0 : index
    %c0_30 = arith.constant 0 : index
    %46 = vector.load %arg12[%c0_29, %c0_30] : memref<1x32xf32, #tpu.memory_space<vmem>>, vector<1x32xf32>
    %47 = vector.broadcast %46 : vector<1x32xf32> to vector<8x32xf32>
    %48 = arith.addf %45, %47 : vector<8x32xf32>
    %49 = math.tanh %48 : vector<8x32xf32>
    %c0_31 = arith.constant 0 : index
    %c0_32 = arith.constant 0 : index
    %50 = vector.load %arg13[%c0_31, %c0_32] : memref<32x4xf32, #tpu.memory_space<vmem>>, vector<32x4xf32>
    %cst_33 = arith.constant dense<0.000000e+00> : vector<8x4xf32>
    %51 = tpu.matmul %49, %50, %cst_33 {dimension_numbers = #tpu.dot_dimension_numbers<[1], [0], [0], [1], [0, 0, 1, 1], [], []>} : vector<8x32xf32>, vector<32x4xf32>, vector<8x4xf32> -> vector<8x4xf32>
    %c0_34 = arith.constant 0 : index
    %c0_35 = arith.constant 0 : index
    %52 = vector.load %arg14[%c0_34, %c0_35] : memref<1x4xf32, #tpu.memory_space<vmem>>, vector<1x4xf32>
    %53 = vector.broadcast %52 : vector<1x4xf32> to vector<8x4xf32>
    %54 = arith.addf %51, %53 : vector<8x4xf32>
    %55 = tpu.concatenate %54, %26, %36 in 1 : vector<8x4xf32>, vector<8x8xf32>, vector<8x32xf32> -> vector<8x44xf32>
    %c0_36 = arith.constant 0 : index
    %c0_37 = arith.constant 0 : index
    %56 = vector.load %arg15[%c0_36, %c0_37] : memref<8x44xf32, #tpu.memory_space<vmem>>, vector<8x44xf32>
    tpu.vector_store %arg15[%c0_36, %c0_37], %55 {strides = array<i32>} : memref<8x44xf32, #tpu.memory_space<vmem>>, vector<8x44xf32>,
    return
  }
  func.func @transform_0(%arg0: i32) -> (i32, i32) {
    %c0_i32 = arith.constant 0 : i32
    %c0_i32_0 = arith.constant 0 : i32
    return %arg0, %c0_i32 : i32, i32
  }
  func.func @transform_1(%arg0: i32) -> (i32, i32) {
    %c0_i32 = arith.constant 0 : i32
    %c0_i32_0 = arith.constant 0 : i32
    %c0_i32_1 = arith.constant 0 : i32
    return %c0_i32, %c0_i32_0 : i32, i32
  }
  func.func @transform_2(%arg0: i32) -> (i32, i32) {
    %c0_i32 = arith.constant 0 : i32
    %c0_i32_0 = arith.constant 0 : i32
    %c0_i32_1 = arith.constant 0 : i32
    return %c0_i32, %c0_i32_0 : i32, i32
  }
  func.func @transform_3(%arg0: i32) -> (i32, i32) {
    %c0_i32 = arith.constant 0 : i32
    %c0_i32_0 = arith.constant 0 : i32
    %c0_i32_1 = arith.constant 0 : i32
    return %c0_i32, %c0_i32_0 : i32, i32
  }
  func.func @transform_4(%arg0: i32) -> (i32, i32) {
    %c0_i32 = arith.constant 0 : i32
    %c0_i32_0 = arith.constant 0 : i32
    %c0_i32_1 = arith.constant 0 : i32
    return %c0_i32, %c0_i32_0 : i32, i32
  }
  func.func @transform_5(%arg0: i32) -> (i32, i32) {
    %c0_i32 = arith.constant 0 : i32
    %c0_i32_0 = arith.constant 0 : i32
    %c0_i32_1 = arith.constant 0 : i32
    return %c0_i32, %c0_i32_0 : i32, i32
  }
  func.func @transform_6(%arg0: i32) -> (i32, i32) {
    %c0_i32 = arith.constant 0 : i32
    %c0_i32_0 = arith.constant 0 : i32
    %c0_i32_1 = arith.constant 0 : i32
    return %c0_i32, %c0_i32_0 : i32, i32
  }
  func.func @transform_7(%arg0: i32) -> (i32, i32) {
    %c0_i32 = arith.constant 0 : i32
    %c0_i32_0 = arith.constant 0 : i32
    %c0_i32_1 = arith.constant 0 : i32
    return %c0_i32, %c0_i32_0 : i32, i32
  }
  func.func @transform_8(%arg0: i32) -> (i32, i32) {
    %c0_i32 = arith.constant 0 : i32
    %c0_i32_0 = arith.constant 0 : i32
    %c0_i32_1 = arith.constant 0 : i32
    return %c0_i32, %c0_i32_0 : i32, i32
  }
  func.func @transform_9(%arg0: i32) -> (i32, i32) {
    %c0_i32 = arith.constant 0 : i32
    %c0_i32_0 = arith.constant 0 : i32
    %c0_i32_1 = arith.constant 0 : i32
    return %c0_i32, %c0_i32_0 : i32, i32
  }
  func.func @transform_10(%arg0: i32) -> (i32, i32) {
    %c0_i32 = arith.constant 0 : i32
    %c0_i32_0 = arith.constant 0 : i32
    %c0_i32_1 = arith.constant 0 : i32
    return %c0_i32, %c0_i32_0 : i32, i32
  }
  func.func @transform_11(%arg0: i32) -> (i32, i32) {
    %c0_i32 = arith.constant 0 : i32
    %c0_i32_0 = arith.constant 0 : i32
    %c0_i32_1 = arith.constant 0 : i32
    return %c0_i32, %c0_i32_0 : i32, i32
  }
  func.func @transform_12(%arg0: i32) -> (i32, i32) {
    %c0_i32 = arith.constant 0 : i32
    %c0_i32_0 = arith.constant 0 : i32
    %c0_i32_1 = arith.constant 0 : i32
    return %c0_i32, %c0_i32_0 : i32, i32
  }
  func.func @transform_13(%arg0: i32) -> (i32, i32) {
    %c0_i32 = arith.constant 0 : i32
    %c0_i32_0 = arith.constant 0 : i32
    %c0_i32_1 = arith.constant 0 : i32
    return %c0_i32, %c0_i32_0 : i32, i32
  }
  func.func @transform_14(%arg0: i32) -> (i32, i32) {
    %c0_i32 = arith.constant 0 : i32
    %c0_i32_0 = arith.constant 0 : i32
    return %arg0, %c0_i32 : i32, i32
  }
}

</mosaic_0001>

<llo_original>
// kernel: tpu_custom_call.1
$region0: #{tpu_custom_call.1}
  #allocation0 [shape = 'u32[]', space=smem, size = 0x4, offset = 0x4, fixed_abs, tag = 'smem constant byte address 0x4 - core index']
  #allocation1 [shape = 'u32[72,128]{1,0:T(1,128)}', space=vmem, size = 0x9000, scoped, tag = 'internal scratch']
  %s0 = inlined_call_operand.vmem [shape: f32[8,32], index: 0, kind: input, shape index: {}]
  %s1 = inlined_call_operand.hbm [shape: f32[1,32], index: 1, kind: input, shape index: {}]
  %s2 = inlined_call_operand.vmem [shape: f32[32,32], index: 2, kind: input, shape index: {}]
  %s3 = inlined_call_operand.hbm [shape: f32[1,32], index: 3, kind: input, shape index: {}]
  %s4 = inlined_call_operand.vmem [shape: f32[32,32], index: 4, kind: input, shape index: {}]
  %s5 = inlined_call_operand.hbm [shape: f32[1,32], index: 5, kind: input, shape index: {}]
  %s6 = inlined_call_operand.vmem [shape: f32[32,8], index: 6, kind: input, shape index: {}]
  %s7 = inlined_call_operand.hbm [shape: f32[1,8], index: 7, kind: input, shape index: {}]
  %s8 = inlined_call_operand.vmem [shape: f32[8,32], index: 8, kind: input, shape index: {}]
  %s9 = inlined_call_operand.hbm [shape: f32[1,32], index: 9, kind: input, shape index: {}]
  %s10 = inlined_call_operand.hbm [shape: f32[32,32], index: 10, kind: input, shape index: {}]
  %s11 = inlined_call_operand.vmem [shape: f32[1,32], index: 11, kind: input, shape index: {}]
  %s12 = inlined_call_operand.vmem [shape: f32[32,4], index: 12, kind: input, shape index: {}]
  %s13 = inlined_call_operand.vmem [shape: f32[1,4], index: 13, kind: input, shape index: {}]
  %s14 = inlined_call_operand.hbm [shape: f32[8,44], index: 14, kind: output, shape index: {}]
  %s15 = sld [smem:[#allocation0]]
  $region90: #{tpu_custom_call.1} parent=0
    _
  %s17 = ssub.s32 1, %s15
  %s18 = scalar_select 0, %s17, %s15
  $region1: #{tpu_custom_call.1} parent=0
    #allocation2 [shape = 'u8[512]{0}', space=vmem, size = 0x400, scoped, tag = 'input window, operand 1, single buffered']
    #allocation3 [shape = 's32[1]{0}', space=sflag, size = 0x4, scoped, tag = 'scoped memory for tpu_custom_call.1']
    #allocation4 [shape = 's32[1]{0}', space=sflag, size = 0x4, scoped, tag = 'scoped memory for tpu_custom_call.1']
    #allocation5 [shape = 'u8[512]{0}', space=vmem, size = 0x400, scoped, tag = 'input window, operand 3, single buffered']
    #allocation6 [shape = 's32[1]{0}', space=sflag, size = 0x4, scoped, tag = 'scoped memory for tpu_custom_call.1']
    #allocation7 [shape = 'u8[512]{0}', space=vmem, size = 0x400, scoped, tag = 'input window, operand 5, single buffered']
    #allocation8 [shape = 'u8[512]{0}', space=vmem, size = 0x400, scoped, tag = 'input window, operand 7, single buffered']
    #allocation9 [shape = 's32[1]{0}', space=sflag, size = 0x4, scoped, tag = 'scoped memory for tpu_custom_call.1']
    #allocation10 [shape = 'u8[512]{0}', space=vmem, size = 0x400, scoped, tag = 'input window, operand 9, single buffered']
    #allocation11 [shape = 'u8[16384]{0}', space=vmem, size = 0x4000, scoped, tag = 'input window, operand 10, single buffered']
    #allocation12 [shape = 's32[1]{0}', space=sflag, size = 0x4, scoped, tag = 'scoped memory for tpu_custom_call.1']
    #allocation13 [shape = 'u8[4096]{0}', space=vmem, size = 0x1000, scoped, tag = 'output window, operand 0, single buffered']
    %19 = vsyncpa [#allocation3], 0
    %20 = vsyncpa [#allocation6], 0
    %21 = vsyncpa [#allocation9], 0
    %22 = vsyncpa [#allocation12], 0
    %23 = vsyncpa [#allocation4], 0
    // Predicated region
    $region2: #{tpu_custom_call.1} parent=1 // pred_check
      _
    $region3: #{tpu_custom_call.1} parent=1 // pred_check_branch
      %25 = sbr.rel (0) target = $region5
    $region4: #{tpu_custom_call.1} parent=1 // pred_region
      _
    $region5: #{tpu_custom_call.1} parent=1 // pred_fallthru
      _
    // Predicated region
    $region6: #{tpu_custom_call.1} parent=1 // pred_check
      _
    $region7: #{tpu_custom_call.1} parent=1 // pred_check_branch
      %27 = sbr.rel (0) target = $region9
    $region8: #{tpu_custom_call.1} parent=1 // pred_region
      %29 = vsyncadd [#allocation3], 0
      %s31 = sshll.u32 %s1, 4
      %s32 = int_to_ptr.hbm [resolvable:$true] %s31
      %s33 = sshll.u32 [#allocation2], 4
      %s34 = int_to_ptr.vmem [resolvable:$true] %s33
      %36 = dma.hbm_to_vmem [thread:$0]  %s32, 16, %s34, [#allocation3]
    $region9: #{tpu_custom_call.1} parent=1 // pred_fallthru
      _
    // Predicated region
    $region10: #{tpu_custom_call.1} parent=1 // pred_check
      _
    $region11: #{tpu_custom_call.1} parent=1 // pred_check_branch
      %38 = sbr.rel (0) target = $region13
    $region12: #{tpu_custom_call.1} parent=1 // pred_region
      _
    $region13: #{tpu_custom_call.1} parent=1 // pred_fallthru
      _
    // Predicated region
    $region14: #{tpu_custom_call.1} parent=1 // pred_check
      _
    $region15: #{tpu_custom_call.1} parent=1 // pred_check_branch
      %40 = sbr.rel (0) target = $region17
    $region16: #{tpu_custom_call.1} parent=1 // pred_region
      %42 = vsyncadd [#allocation6], 0
      %s44 = sshll.u32 %s3, 4
      %s45 = int_to_ptr.hbm [resolvable:$true] %s44
      %s46 = sshll.u32 [#allocation5], 4
      %s47 = int_to_ptr.vmem [resolvable:$true] %s46
      %49 = dma.hbm_to_vmem [thread:$0]  %s45, 16, %s47, [#allocation6]
    $region17: #{tpu_custom_call.1} parent=1 // pred_fallthru
      _
    // Predicated region
    $region18: #{tpu_custom_call.1} parent=1 // pred_check
      _
    $region19: #{tpu_custom_call.1} parent=1 // pred_check_branch
      %51 = sbr.rel (0) target = $region21
    $region20: #{tpu_custom_call.1} parent=1 // pred_region
      _
    $region21: #{tpu_custom_call.1} parent=1 // pred_fallthru
      _
    // Predicated region
    $region22: #{tpu_custom_call.1} parent=1 // pred_check
      _
    $region23: #{tpu_custom_call.1} parent=1 // pred_check_branch
      %53 = sbr.rel (0) target = $region25
    $region24: #{tpu_custom_call.1} parent=1 // pred_region
      %55 = vsyncadd [#allocation6], 0
      %s57 = sshll.u32 %s5, 4
      %s58 = int_to_ptr.hbm [resolvable:$true] %s57
      %s59 = sshll.u32 [#allocation7], 4
      %s60 = int_to_ptr.vmem [resolvable:$true] %s59
      %62 = dma.hbm_to_vmem [thread:$0]  %s58, 16, %s60, [#allocation6]
    $region25: #{tpu_custom_call.1} parent=1 // pred_fallthru
      _
    // Predicated region
    $region26: #{tpu_custom_call.1} parent=1 // pred_check
      _
    $region27: #{tpu_custom_call.1} parent=1 // pred_check_branch
      %64 = sbr.rel (0) target = $region29
    $region28: #{tpu_custom_call.1} parent=1 // pred_region
      _
    $region29: #{tpu_custom_call.1} parent=1 // pred_fallthru
      _
    // Predicated region
    $region30: #{tpu_custom_call.1} parent=1 // pred_check
      _
    $region31: #{tpu_custom_call.1} parent=1 // pred_check_branch
      %66 = sbr.rel (0) target = $region33
    $region32: #{tpu_custom_call.1} parent=1 // pred_region
      %68 = vsyncadd [#allocation9], 0
      %s70 = sshll.u32 %s7, 4
      %s71 = int_to_ptr.hbm [resolvable:$true] %s70
      %s72 = sshll.u32 [#allocation8], 4
      %s73 = int_to_ptr.vmem [resolvable:$true] %s72
      %75 = dma.hbm_to_vmem [thread:$0]  %s71, 16, %s73, [#allocation9]
    $region33: #{tpu_custom_call.1} parent=1 // pred_fallthru
      _
    // Predicated region
    $region34: #{tpu_custom_call.1} parent=1 // pred_check
      _
    $region35: #{tpu_custom_call.1} parent=1 // pred_check_branch
      %77 = sbr.rel (0) target = $region37
    $region36: #{tpu_custom_call.1} parent=1 // pred_region
      _
    $region37: #{tpu_custom_call.1} parent=1 // pred_fallthru
      _
    // Predicated region
    $region38: #{tpu_custom_call.1} parent=1 // pred_check
      _
    $region39: #{tpu_custom_call.1} parent=1 // pred_check_branch
      %79 = sbr.rel (0) target = $region41
    $region40: #{tpu_custom_call.1} parent=1 // pred_region
      %81 = vsyncadd [#allocation9], 0
      %s83 = sshll.u32 %s9, 4
      %s84 = int_to_ptr.hbm [resolvable:$true] %s83
      %s85 = sshll.u32 [#allocation10], 4
      %s86 = int_to_ptr.vmem [resolvable:$true] %s85
      %88 = dma.hbm_to_vmem [thread:$0]  %s84, 16, %s86, [#allocation9]
    $region41: #{tpu_custom_call.1} parent=1 // pred_fallthru
      _
    // Predicated region
    $region42: #{tpu_custom_call.1} parent=1 // pred_check
      _
    $region43: #{tpu_custom_call.1} parent=1 // pred_check_branch
      %90 = sbr.rel (0) target = $region45
    $region44: #{tpu_custom_call.1} parent=1 // pred_region
      %92 = vsyncadd [#allocation12], 0
      %s93 = sshll.u32 %s10, 4
      %s94 = int_to_ptr.hbm [resolvable:$true] %s93
      %s95 = sshll.u32 [#allocation11], 4
      %s96 = int_to_ptr.vmem [resolvable:$true] %s95
      %101 = dma.hbm_to_vmem [thread:$0]  %s94, 512, %s96, [#allocation12], 128, 128, 8
    $region45: #{tpu_custom_call.1} parent=1 // pred_fallthru
      _
    // Predicated region
    $region46: #{tpu_custom_call.1} parent=1 // pred_check
      _
    $region47: #{tpu_custom_call.1} parent=1 // pred_check_branch
      %103 = sbr.rel (0) target = $region49
    $region48: #{tpu_custom_call.1} parent=1 // pred_region
      _
    $region49: #{tpu_custom_call.1} parent=1 // pred_fallthru
      _
    // Predicated region
    $region50: #{tpu_custom_call.1} parent=1 // pred_check
      _
    $region51: #{tpu_custom_call.1} parent=1 // pred_check_branch
      %105 = sbr.rel (0) target = $region53
    $region52: #{tpu_custom_call.1} parent=1 // pred_region
      _
    $region53: #{tpu_custom_call.1} parent=1 // pred_fallthru
      _
    // Predicated region
    $region54: #{tpu_custom_call.1} parent=1 // pred_check
      _
    $region55: #{tpu_custom_call.1} parent=1 // pred_check_branch
      %107 = sbr.rel (0) target = $region57
    $region56: #{tpu_custom_call.1} parent=1 // pred_region
      _
    $region57: #{tpu_custom_call.1} parent=1 // pred_fallthru
      _
    // Predicated region
    $region58: #{tpu_custom_call.1} parent=1 // pred_check
      _
    $region59: #{tpu_custom_call.1} parent=1 // pred_check_branch
      %109 = sbr.rel (0) target = $region61
    $region60: #{tpu_custom_call.1} parent=1 // pred_region
      %111 = dma.done [#allocation3], 16
    $region61: #{tpu_custom_call.1} parent=1 // pred_fallthru
      _
    // Predicated region
    $region62: #{tpu_custom_call.1} parent=1 // pred_check
      _
    $region63: #{tpu_custom_call.1} parent=1 // pred_check_branch
      %113 = sbr.rel (0) target = $region65
    $region64: #{tpu_custom_call.1} parent=1 // pred_region
      %115 = dma.done [#allocation6], 16
    $region65: #{tpu_custom_call.1} parent=1 // pred_fallthru
      _
    // Predicated region
    $region66: #{tpu_custom_call.1} parent=1 // pred_check
      _
    $region67: #{tpu_custom_call.1} parent=1 // pred_check_branch
      %117 = sbr.rel (0) target = $region69
    $region68: #{tpu_custom_call.1} parent=1 // pred_region
      %119 = dma.done [#allocation6], 16
    $region69: #{tpu_custom_call.1} parent=1 // pred_fallthru
      _
    // Predicated region
    $region70: #{tpu_custom_call.1} parent=1 // pred_check
      _
    $region71: #{tpu_custom_call.1} parent=1 // pred_check_branch
      %121 = sbr.rel (0) target = $region73
    $region72: #{tpu_custom_call.1} parent=1 // pred_region
      %123 = dma.done [#allocation9], 16
    $region73: #{tpu_custom_call.1} parent=1 // pred_fallthru
      _
    // Predicated region
    $region74: #{tpu_custom_call.1} parent=1 // pred_check
      _
    $region75: #{tpu_custom_call.1} parent=1 // pred_check_branch
      %125 = sbr.rel (0) target = $region77
    $region76: #{tpu_custom_call.1} parent=1 // pred_region
      %127 = dma.done [#allocation9], 16
    $region77: #{tpu_custom_call.1} parent=1 // pred_fallthru
      _
    // Predicated region
    $region78: #{tpu_custom_call.1} parent=1 // pred_check
      _
    $region79: #{tpu_custom_call.1} parent=1 // pred_check_branch
      %129 = sbr.rel (0) target = $region81
    $region80: #{tpu_custom_call.1} parent=1 // pred_region
      %131 = dma.done [#allocation12], 512
    $region81: #{tpu_custom_call.1} parent=1 // pred_fallthru
      _
    %v132 = vld [vmem:[%s0] sm:$0xff]
    %v133 = vld [vmem:[%s2] sm:$0xff]
    %v134 = vld [vmem:[%s2 + $0x8] sm:$0xff]
    %v135 = vld [vmem:[%s2 + $0x10] sm:$0xff]
    %v136 = vld [vmem:[%s2 + $0x18] sm:$0xff]
    %v137 = vld [vmem:[#allocation5] sm:$0x1]
    %v139 = vperm.slane %v137, 0
    %vm141 = vcmask 261120
    %v143 = vsel %vm141, %v132, 0
    %145 = vmatpush.msra.mxu0 0.0
    %146 = vmatpush.msra.mxu0 0.0
    %147 = vmatpush.msra.mxu0 0.0
    %148 = vmatpush.msra.mxu0 0.0
    %149 = vmatpush.msra.mxu0 0.0
    %150 = vmatpush.msra.mxu0 0.0
    %151 = vmatpush.msra.mxu0 0.0
    %152 = vmatpush.msra.mxu0 0.0
    %153 = vmatpush.msra.mxu0 0.0
    %154 = vmatpush.msra.mxu0 0.0
    %155 = vmatpush.msra.mxu0 0.0
    %156 = vmatpush.msra.mxu0 0.0
    %157 = vmatpush.msra.mxu0 %v136
    %158 = vmatpush.msra.mxu0 %v135
    %159 = vmatpush.msra.mxu0 %v134
    %160 = vmatpush.msra.mxu0 %v133
    %161 = vmatmul.f32.gmra.mxu0 %v143
    %v162 = vpop.f32.mrf.mxu0
    %v163 = vadd.f32 %v139, %v162
    %164 = vdwg.mxu0
    %v165 = vtanh.pop %v163
    %v166 = vld [vmem:[%s4] sm:$0xff]
    %v167 = vld [vmem:[%s4 + $0x8] sm:$0xff]
    %v168 = vld [vmem:[%s4 + $0x10] sm:$0xff]
    %v169 = vld [vmem:[%s4 + $0x18] sm:$0xff]
    %v170 = vld [vmem:[#allocation7] sm:$0x1]
    %v172 = vperm.slane %v170, 0
    %v175 = vsel %vm141, %v165, 0
    %177 = vmatpush.msra.mxu0 0.0
    %178 = vmatpush.msra.mxu0 0.0
    %179 = vmatpush.msra.mxu0 0.0
    %180 = vmatpush.msra.mxu0 0.0
    %181 = vmatpush.msra.mxu0 0.0
    %182 = vmatpush.msra.mxu0 0.0
    %183 = vmatpush.msra.mxu0 0.0
    %184 = vmatpush.msra.mxu0 0.0
    %185 = vmatpush.msra.mxu0 0.0
    %186 = vmatpush.msra.mxu0 0.0
    %187 = vmatpush.msra.mxu0 0.0
    %188 = vmatpush.msra.mxu0 0.0
    %189 = vmatpush.msra.mxu0 %v169
    %190 = vmatpush.msra.mxu0 %v168
    %191 = vmatpush.msra.mxu0 %v167
    %192 = vmatpush.msra.mxu0 %v166
    %193 = vmatmul.f32.gmra.mxu0 %v175
    %v194 = vpop.f32.mrf.mxu0
    %v195 = vadd.f32 %v172, %v194
    %196 = vdwg.mxu0
    %v197 = vtanh.pop %v195
    %v198 = vld [vmem:[%s6] sm:$0xff]
    %v199 = vld [vmem:[%s6 + $0x8] sm:$0xff]
    %v200 = vld [vmem:[%s6 + $0x10] sm:$0xff]
    %v201 = vld [vmem:[%s6 + $0x18] sm:$0xff]
    %v202 = vld [vmem:[#allocation8] sm:$0x1]
    %v204 = vperm.slane %v202, 0
    %v207 = vsel %vm141, %v197, 0
    %209 = vmatpush.msra.mxu0 0.0
    %210 = vmatpush.msra.mxu0 0.0
    %211 = vmatpush.msra.mxu0 0.0
    %212 = vmatpush.msra.mxu0 0.0
    %213 = vmatpush.msra.mxu0 0.0
    %214 = vmatpush.msra.mxu0 0.0
    %215 = vmatpush.msra.mxu0 0.0
    %216 = vmatpush.msra.mxu0 0.0
    %217 = vmatpush.msra.mxu0 0.0
    %218 = vmatpush.msra.mxu0 0.0
    %219 = vmatpush.msra.mxu0 0.0
    %220 = vmatpush.msra.mxu0 0.0
    %221 = vmatpush.msra.mxu0 %v201
    %222 = vmatpush.msra.mxu0 %v200
    %223 = vmatpush.msra.mxu0 %v199
    %224 = vmatpush.msra.mxu0 %v198
    %225 = vmatmul.f32.gmra.mxu0 %v207
    %v226 = vpop.f32.mrf.mxu0
    %v227 = vadd.f32 %v204, %v226
    %228 = vdwg.mxu0
    %vm229 = vcmask 64512
    %v230 = vsel %vm229, %v227, -inf
    %231 = vmax.xlane.f32.xlu0 %v230
    %v232 = vpop.xlane.xlu0 %231
    %v233 = vsub.f32 %v227, %v232
    %v234 = vmul.f32 %v233, 1.442695
    %v235 = vpow.pop %v234
    %v236 = vsel %vm229, %v235, 0.0
    %237 = vadd.xlane.f32.xlu0 %v236
    %v238 = vpop.xlane.xlu0 %237
    %v239 = vrcp.pop %v238
    %v240 = vmul.f32 %v238, %v239
    %v241 = vsub.f32 1.0, %v240
    %v242 = vmul.f32 %v239, %v241
    %v243 = vadd.f32 %v239, %v242
    %vm244 = vweird.f32 %v238
    %vm245 = vweird.f32 %v239
    %vm246 = vmor %vm244, %vm245
    %v247 = vsel %vm246, %v239, %v243
    %v248 = vand.u32 2147483647, %v238
    %vm249 = vcmp.eq.f32.partialorder %v248, 8.507059e+37
    %v250 = vand.u32 %v238, 2147483648
    %v251 = vor.u32 1.1754944e-38, %v250
    %v252 = vsel %vm249, %v251, %v247
    %v253 = vmul.f32 %v235, %v252
    %v254 = vld [vmem:[%s8] sm:$0xff]
    %v255 = vld [vmem:[#allocation10] sm:$0x1]
    %v257 = vperm.slane %v255, 0
    %v260 = vsel %vm229, %v253, 0
    %262 = vmatpush.msra.mxu0 0.0
    %263 = vmatpush.msra.mxu0 0.0
    %264 = vmatpush.msra.mxu0 0.0
    %265 = vmatpush.msra.mxu0 0.0
    %266 = vmatpush.msra.mxu0 0.0
    %267 = vmatpush.msra.mxu0 0.0
    %268 = vmatpush.msra.mxu0 0.0
    %269 = vmatpush.msra.mxu0 0.0
    %270 = vmatpush.msra.mxu0 0.0
    %271 = vmatpush.msra.mxu0 0.0
    %272 = vmatpush.msra.mxu0 0.0
    %273 = vmatpush.msra.mxu0 0.0
    %274 = vmatpush.msra.mxu0 0.0
    %275 = vmatpush.msra.mxu0 0.0
    %276 = vmatpush.msra.mxu0 0.0
    %277 = vmatpush.msra.mxu0 %v254
    %278 = vmatmul.f32.gmra.mxu0 %v260
    %v279 = vpop.f32.mrf.mxu0
    %v280 = vadd.f32 %v257, %v279
    %281 = vdwg.mxu0
    %v282 = vxor.u32 %v280, 2147483648
    %v283 = vmul.f32 %v282, 1.442695
    %v284 = vpow.pop %v283
    %v285 = vadd.f32 %v284, 1.0
    %v286 = vrcp.pop %v285
    %v287 = vmul.f32 %v285, %v286
    %v288 = vsub.f32 1.0, %v287
    %v289 = vmul.f32 %v286, %v288
    %v290 = vadd.f32 %v286, %v289
    %vm291 = vweird.f32 %v285
    %vm292 = vweird.f32 %v286
    %vm293 = vmor %vm291, %vm292
    %v294 = vsel %vm293, %v286, %v290
    %v295 = vand.u32 2147483647, %v285
    %vm296 = vcmp.eq.f32.partialorder %v295, 8.507059e+37
    %v297 = vand.u32 %v285, 2147483648
    %v298 = vor.u32 1.1754944e-38, %v297
    %v299 = vsel %vm296, %v298, %v294
    %v300 = vmul.f32 1.0, %v299
    %v301 = vmul.f32 %v300, %v132
    %v302 = vsub.f32 1.0, %v300
    %v303 = vld [vmem:[#allocation2] sm:$0x1]
    %v305 = vperm.slane %v303, 0
    %v307 = vmul.f32 %v302, %v305
    %v308 = vadd.f32 %v301, %v307
    %v309 = vld [vmem:[#allocation11] sm:$0xff]
    %v310 = vld [vmem:[#allocation11 + $0x8] sm:$0xff]
    %v311 = vld [vmem:[#allocation11 + $0x10] sm:$0xff]
    %v312 = vld [vmem:[#allocation11 + $0x18] sm:$0xff]
    %v313 = vld [vmem:[%s11] sm:$0x1]
    %v315 = vperm.slane %v313, 0
    %v318 = vsel %vm141, %v308, 0
    %320 = vmatpush.msra.mxu0 0.0
    %321 = vmatpush.msra.mxu0 0.0
    %322 = vmatpush.msra.mxu0 0.0
    %323 = vmatpush.msra.mxu0 0.0
    %324 = vmatpush.msra.mxu0 0.0
    %325 = vmatpush.msra.mxu0 0.0
    %326 = vmatpush.msra.mxu0 0.0
    %327 = vmatpush.msra.mxu0 0.0
    %328 = vmatpush.msra.mxu0 0.0
    %329 = vmatpush.msra.mxu0 0.0
    %330 = vmatpush.msra.mxu0 0.0
    %331 = vmatpush.msra.mxu0 0.0
    %332 = vmatpush.msra.mxu0 %v312
    %333 = vmatpush.msra.mxu0 %v311
    %334 = vmatpush.msra.mxu0 %v310
    %335 = vmatpush.msra.mxu0 %v309
    %336 = vmatmul.f32.gmra.mxu0 %v318
    %v337 = vpop.f32.mrf.mxu0
    %v338 = vadd.f32 %v315, %v337
    %339 = vdwg.mxu0
    %v340 = vtanh.pop %v338
    %v341 = vld [vmem:[%s12] sm:$0xff]
    %v342 = vld [vmem:[%s12 + $0x8] sm:$0xff]
    %v343 = vld [vmem:[%s12 + $0x10] sm:$0xff]
    %v344 = vld [vmem:[%s12 + $0x18] sm:$0xff]
    %v345 = vld [vmem:[%s13] sm:$0x1]
    %v347 = vperm.slane %v345, 0
    %v350 = vsel %vm141, %v340, 0
    %352 = vmatpush.msra.mxu0 0.0
    %353 = vmatpush.msra.mxu0 0.0
    %354 = vmatpush.msra.mxu0 0.0
    %355 = vmatpush.msra.mxu0 0.0
    %356 = vmatpush.msra.mxu0 0.0
    %357 = vmatpush.msra.mxu0 0.0
    %358 = vmatpush.msra.mxu0 0.0
    %359 = vmatpush.msra.mxu0 0.0
    %360 = vmatpush.msra.mxu0 0.0
    %361 = vmatpush.msra.mxu0 0.0
    %362 = vmatpush.msra.mxu0 0.0
    %363 = vmatpush.msra.mxu0 0.0
    %364 = vmatpush.msra.mxu0 %v344
    %365 = vmatpush.msra.mxu0 %v343
    %366 = vmatpush.msra.mxu0 %v342
    %367 = vmatpush.msra.mxu0 %v341
    %368 = vmatmul.f32.gmra.mxu0 %v350
    %v369 = vpop.f32.mrf.mxu0
    %v370 = vadd.f32 %v347, %v369
    %371 = vdwg.mxu0
    %372 = vrot.lane.b32.xlu0 %v253, 4
    %v373 = vpop.permute.xlu0 %372
    %376 = vrot.lane.b32.xlu0 %v300, 12
    %v377 = vpop.permute.xlu0 %376
    %vm379 = vcmask 31744
    %v380 = vsel %vm379, %v370, %v373
    %vm381 = vcmask 97280
    %v382 = vsel %vm381, %v380, %v377
    %vm383 = vcmask 359424
    %384 = vst.msk [vmem:[#allocation13] sm:$0xff] %vm383, %v382
    // Predicated region
    $region82: #{tpu_custom_call.1} parent=1 // pred_check
      _
    $region83: #{tpu_custom_call.1} parent=1 // pred_check_branch
      %386 = sbr.rel (0) target = $region85
    $region84: #{tpu_custom_call.1} parent=1 // pred_region
      %388 = vsyncadd [#allocation4], 0
      %s390 = sshll.u32 [#allocation13], 4
      %s391 = int_to_ptr.vmem [resolvable:$true] %s390
      %s392 = sshll.u32 %s14, 4
      %s393 = int_to_ptr.hbm [resolvable:$true] %s392
      %395 = dma.vmem_to_hbm [thread:$0]  %s391, 128, %s393, [#allocation4]
    $region85: #{tpu_custom_call.1} parent=1 // pred_fallthru
      _
    // Predicated region
    $region86: #{tpu_custom_call.1} parent=1 // pred_check
      _
    $region87: #{tpu_custom_call.1} parent=1 // pred_check_branch
      %397 = sbr.rel (0) target = $region89
    $region88: #{tpu_custom_call.1} parent=1 // pred_region
      %399 = dma.done [#allocation4], 128
    $region89: #{tpu_custom_call.1} parent=1 // pred_fallthru
      _
    %400 = vsyncpa [#allocation3], 1
    %401 = vsyncpa [#allocation6], 1
    %402 = vsyncpa [#allocation9], 1
    %403 = vsyncpa [#allocation12], 1
    %404 = vsyncpa [#allocation4], 1

</llo_original>
